<compile_context>
chip_gen: v7x
topology: tpu7x:2x2x1
jax: 0.10.0
libtpu: 0.0.40
codegen_flags: <defaults>
</compile_context>

<pallas_src>
import math

import jax
import jax.numpy as jnp
from jax import lax
from jax.experimental import pallas as pl
from jax.experimental.pallas import tpu as pltpu
import numpy as np


def _make_kernel(C, G, Gpad, IC, W, L):
    """One grid step processes a (C, L) = (C, batch_tile*H*W) activation slab."""
    # The 8 non-centre 3x3 taps (tap index = ky*3+kx, offsets dy, dx).
    taps = [(ky * 3 + kx, ky - 1, kx - 1)
            for ky in range(3) for kx in range(3) if (ky, kx) != (1, 1)]

    def kernel(x_ref, vec_ref, w1s_ref, w2f_ref, mask_ref, out_ref):
        # x_ref   : (C, L)          channel-major input slab (batch on lanes)
        # vec_ref : (max(C,IC), 3)  col0 = BN1 scale, col1 = BN1 shift, col2 = BN2 shift
        # w1s_ref : (IC, C)         1x1 conv weight with BN2 scale folded in
        # w2f_ref : (9*Gpad, IC)    3x3 conv weight, row = tap*Gpad + g (zero-padded rows)
        # mask_ref: (9*Gpad, L)     pre-rolled source-side 0/1 boundary mask
        # out_ref : (C+G, L)
        x = x_ref[...]
        s1 = vec_ref[0:C, 0:1]
        b1 = vec_ref[0:C, 1:2]
        b2 = vec_ref[0:IC, 2:3]

        # BN1 (eval, folded) + ReLU — one lane-dense VPU pass for the whole tile.
        a1 = jnp.maximum(x * s1 + b1, 0.0)

        # 1x1 conv (BN2 scale pre-folded): ONE (IC, C) @ (C, L) MXU matmul.
        h1 = jnp.dot(w1s_ref[...], a1, preferred_element_type=jnp.float32)
        a2 = jnp.maximum(h1 + b2, 0.0)                      # BN2 shift + ReLU

        # 3x3 conv, padding=1: ONE (9*Gpad, IC) @ (IC, L) matmul for all 9 taps,
        # then a single source-side boundary mask and 8 lane rolls (XLU).
        t = jnp.dot(w2f_ref[...], a2, preferred_element_type=jnp.float32)
        t = t * mask_ref[...]

        acc = t[4 * Gpad:5 * Gpad, :]                       # centre tap (aligned slice)
        for tap, dy, dx in taps:
            shift = dy * W + dx
            # rolled[g, l] = t[g, (l + shift) mod L]; any contribution that would
            # cross an image boundary (or the tile wrap) was already zeroed at the
            # source by mask_ref, so no destination mask is needed.
            acc = acc + pltpu.roll(t[tap * Gpad:(tap + 1) * Gpad, :],
                                   (-shift) % L, axis=1)

        # Channel concat: two lane-dense (L-wide, unmasked-lane) slice stores,
        # once per grid step.  (Further micro-opt: a single full-height store or
        # a sync_copy passthrough for x; negligible at one store pair per tile.)
        out_ref[0:C, :] = x.astype(out_ref.dtype)
        out_ref[C:, :] = acc[0:G, :].astype(out_ref.dtype)

    return kernel


def _pick_batch_tile(N, C, G, Gpad, IC, HW, budget_bytes):
    """Largest batch tile whose working set fits the VMEM budget (rough model)."""
    rows = (2 * C + 2 * (C + G) + 2 * 9 * Gpad          # double-buffered x, out, mask tiles
            + C + 2 * IC + 9 * Gpad + Gpad)             # a1, h1/a2, t, acc intermediates
    per_img = 4 * HW * rows
    cap = max(1, budget_bytes // max(per_img, 1))
    # Tile lane width (bt*HW) must be a multiple of 128.
    g = 128 // math.gcd(HW, 128)
    bt = max(g, (min(cap, N) // g) * g)
    return bt


def bottleneck_forward(x_nchw, params, eps=1e-5, batch_tile=None,
                       vmem_budget_bytes=20 * 1024 * 1024):
    """x_nchw: (N, C, H, W) float32. Returns (N, C+growthRate, H, W)."""
    N, C, H, W = x_nchw.shape
    w1 = params["w1"]                      # (IC, C, 1, 1)
    w2 = params["w2"]                      # (G, IC, 3, 3)
    IC = w1.shape[0]
    G = w2.shape[0]
    HW = H * W
    Gpad = -(-G // 8) * 8                  # sublane-aligned rows per 3x3 tap

    # Fold eval-mode BatchNorm into per-channel scale / shift.
    s1 = (params["g1"] / jnp.sqrt(params["v1"] + eps)).astype(jnp.float32)
    sh1 = (params["b1"] - params["m1"] * s1).astype(jnp.float32)
    s2 = (params["g2"] / jnp.sqrt(params["v2"] + eps)).astype(jnp.float32)
    sh2 = (params["b2"] - params["m2"] * s2).astype(jnp.float32)

    # Fold BN2's scale into the 1x1 conv weight (linear fold before ReLU2).
    w1s = (w1[:, :, 0, 0] * s2[:, None]).astype(jnp.float32)            # (IC, C)
    # 3x3 weight with taps stacked on rows, padded to Gpad rows per tap:
    # row tap*Gpad + g  (g < G) holds w2[g, :, ky, kx]; rows g >= G are zero.
    w2_r = jnp.transpose(w2, (2, 3, 0, 1)).reshape(9, G, IC)
    w2f = jnp.pad(w2_r, ((0, 0), (0, Gpad - G), (0, 0))).reshape(9 * Gpad, IC)
    w2f = w2f.astype(jnp.float32)

    # Packed per-channel vectors: one small block instead of three (.,1) blocks.
    CImax = max(C, IC)
    vecs = jnp.zeros((CImax, 3), jnp.float32)
    vecs = vecs.at[:C, 0].set(s1).at[:C, 1].set(sh1).at[:IC, 2].set(sh2)

    if batch_tile is None:
        batch_tile = _pick_batch_tile(N, C, G, Gpad, IC, HW, vmem_budget_bytes)
    # Pad batch to a multiple of the tile (cheaper than shrinking the tile).
    Npad = -(-N // batch_tile) * batch_tile
    L = batch_tile * HW

    # Pre-rolled SOURCE-side boundary masks, replicated to Gpad rows per tap and
    # tiled across the batch_tile images on the lane axis.  Centre-tap rows = 1.
    hh = np.arange(H)[:, None]
    ww = np.arange(W)[None, :]
    mask9 = np.ones((9 * Gpad, HW), np.float32)
    for ky in range(3):
        for kx in range(3):
            if (ky, kx) == (1, 1):
                continue
            dy, dx = ky - 1, kx - 1
            dst_valid = ((hh + dy >= 0) & (hh + dy < H) &
                         (ww + dx >= 0) & (ww + dx < W)).reshape(-1)
            src_valid = np.roll(dst_valid.astype(np.float32), dy * W + dx)
            tap = ky * 3 + kx
            mask9[tap * Gpad:(tap + 1) * Gpad, :] = src_valid[None, :]
    tap_mask = jnp.asarray(np.tile(mask9, (1, batch_tile)))             # (9*Gpad, L)

    # Channel-major, batch-on-lanes layout: (C, Npad*HW).  (In a full DenseNet
    # this layout would be kept between layers to avoid the two transposes.)
    x_flat = x_nchw.reshape(N, C, HW).astype(jnp.float32)
    if Npad != N:
        x_flat = jnp.pad(x_flat, ((0, Npad - N), (0, 0), (0, 0)))
    x_cm = jnp.transpose(x_flat, (1, 0, 2)).reshape(C, Npad * HW)

    kernel = _make_kernel(C, G, Gpad, IC, W, L)

    out_cm = pl.pallas_call(
        kernel,
        out_shape=jax.ShapeDtypeStruct((C + G, Npad * HW), jnp.float32),
        grid_spec=pltpu.PrefetchScalarGridSpec(
            num_scalar_prefetch=0,
            grid=(Npad // batch_tile,),
            in_specs=[
                pl.BlockSpec((C, L), lambda n: (0, n)),            # x slab
                pl.BlockSpec((CImax, 3), lambda n: (0, 0)),        # packed BN vectors
                pl.BlockSpec((IC, C), lambda n: (0, 0)),           # folded 1x1 weight
                pl.BlockSpec((9 * Gpad, IC), lambda n: (0, 0)),    # padded 3x3 tap weight
                pl.BlockSpec((9 * Gpad, L), lambda n: (0, 0)),     # source-side mask
            ],
            out_specs=pl.BlockSpec((C + G, L), lambda n: (0, n)),
        ),
        compiler_params=pltpu.CompilerParams(
            dimension_semantics=("parallel",),
            vmem_limit_bytes=48 * 1024 * 1024),
    )(x_cm, vecs, w1s, w2f, tap_mask)

    out = jnp.transpose(out_cm.reshape(C + G, Npad, HW), (1, 0, 2))[:N]
    return out.reshape(N, C + G, H, W)


def ref_forward(x_nchw, params, eps=1e-5):
    """Pure-JAX reference (lax.conv) for verification."""
    def bn(x, g, b, m, v):
        g, b, m, v = (t[None, :, None, None] for t in (g, b, m, v))
        return (x - m) / jnp.sqrt(v + eps) * g + b

    a1 = jax.nn.relu(bn(x_nchw, params["g1"], params["b1"], params["m1"], params["v1"]))
    o1 = lax.conv_general_dilated(a1, params["w1"], (1, 1), "VALID",
                                  dimension_numbers=("NCHW", "OIHW", "NCHW"))
    a2 = jax.nn.relu(bn(o1, params["g2"], params["b2"], params["m2"], params["v2"]))
    o2 = lax.conv_general_dilated(a2, params["w2"], (1, 1), ((1, 1), (1, 1)),
                                  dimension_numbers=("NCHW", "OIHW", "NCHW"))
    return jnp.concatenate([x_nchw, o2], axis=1)


if __name__ == "__main__":
    # Small shapes consistent with the module: nChannels=4, growthRate=4 -> interChannels=16.
    N, C, H, W = 2, 4, 16, 16
    growth = 4
    inter = 4 * growth

    key = jax.random.PRNGKey(0)
    keys = jax.random.split(key, 11)

    # Deterministic synthetic parameters (eval-mode BatchNorm stats included).
    params = {
        "g1": 1.0 + 0.1 * jax.random.normal(keys[0], (C,), jnp.float32),
        "b1": 0.1 * jax.random.normal(keys[1], (C,), jnp.float32),
        "m1": 0.05 * jax.random.normal(keys[2], (C,), jnp.float32),
        "v1": 1.0 + 0.1 * jax.random.uniform(keys[3], (C,), jnp.float32),
        "w1": jax.random.normal(keys[4], (inter, C, 1, 1), jnp.float32) * (1.0 / np.sqrt(C)),
        "g2": 1.0 + 0.1 * jax.random.normal(keys[5], (inter,), jnp.float32),
        "b2": 0.1 * jax.random.normal(keys[6], (inter,), jnp.float32),
        "m2": 0.05 * jax.random.normal(keys[7], (inter,), jnp.float32),
        "v2": 1.0 + 0.1 * jax.random.uniform(keys[8], (inter,), jnp.float32),
        "w2": jax.random.normal(keys[9], (growth, inter, 3, 3), jnp.float32) * (1.0 / np.sqrt(9 * inter)),
    }
    x = jax.random.normal(keys[10], (N, C, H, W), jnp.float32)

    out = bottleneck_forward(x, params)
    out = jax.block_until_ready(out)

    ref = jax.block_until_ready(ref_forward(x, params))
    assert out.shape == (N, C + growth, H, W), out.shape
    np.testing.assert_allclose(np.asarray(out), np.asarray(ref), rtol=1e-4, atol=1e-4)

    print("KERNEL_OK")
</pallas_src>

<mosaic_0001>
module attributes {stable_mosaic.version = 11 : i64} {
  func.func @kernel(%arg0: i32, %arg1: memref<4x512xf32, #tpu.memory_space<vmem>>, %arg2: memref<16x3xf32, #tpu.memory_space<vmem>>, %arg3: memref<16x4xf32, #tpu.memory_space<vmem>>, %arg4: memref<72x16xf32, #tpu.memory_space<vmem>>, %arg5: memref<72x512xf32, #tpu.memory_space<vmem>>, %arg6: memref<8x512xf32, #tpu.memory_space<vmem>>) attributes {dimension_semantics = [#tpu.dimension_semantics<parallel>], iteration_bounds = array<i64: 1>, scalar_prefetch = 0 : i64, scratch_operands = 0 : i64, tpu.core_type = #tpu.core_type<tc>, window_params = [{transform_indices = @transform_0, window_bounds = array<i64: 4, 512>}, {pipeline_mode = #tpu.pipeline_mode<synchronous>, transform_indices = @transform_1, window_bounds = array<i64: 16, 3>}, {pipeline_mode = #tpu.pipeline_mode<synchronous>, transform_indices = @transform_2, window_bounds = array<i64: 16, 4>}, {pipeline_mode = #tpu.pipeline_mode<synchronous>, transform_indices = @transform_3, window_bounds = array<i64: 72, 16>}, {pipeline_mode = #tpu.pipeline_mode<synchronous>, transform_indices = @transform_4, window_bounds = array<i64: 72, 512>}, {transform_indices = @transform_5, window_bounds = array<i64: 8, 512>}]} {
    %c0 = arith.constant 0 : index
    %c0_0 = arith.constant 0 : index
    %0 = vector.load %arg1[%c0, %c0_0] : memref<4x512xf32, #tpu.memory_space<vmem>>, vector<4x512xf32>
    %c0_1 = arith.constant 0 : index
    %c0_2 = arith.constant 0 : index
    %1 = vector.load %arg2[%c0_1, %c0_2] : memref<16x3xf32, #tpu.memory_space<vmem>>, vector<4x1xf32>
    %c0_3 = arith.constant 0 : index
    %c1 = arith.constant 1 : index
    %2 = vector.load %arg2[%c0_3, %c1] : memref<16x3xf32, #tpu.memory_space<vmem>>, vector<4x1xf32>
    %c0_4 = arith.constant 0 : index
    %c2 = arith.constant 2 : index
    %3 = vector.load %arg2[%c0_4, %c2] : memref<16x3xf32, #tpu.memory_space<vmem>>, vector<16x1xf32>
    %4 = vector.broadcast %1 : vector<4x1xf32> to vector<4x512xf32>
    %5 = arith.mulf %0, %4 : vector<4x512xf32>
    %6 = vector.broadcast %2 : vector<4x1xf32> to vector<4x512xf32>
    %7 = arith.addf %5, %6 : vector<4x512xf32>
    %cst = arith.constant 0.000000e+00 : f32
    %8 = vector.broadcast %cst : f32 to vector<4x512xf32>
    %9 = arith.maximumf %7, %8 : vector<4x512xf32>
    %c0_5 = arith.constant 0 : index
    %c0_6 = arith.constant 0 : index
    %10 = vector.load %arg3[%c0_5, %c0_6] : memref<16x4xf32, #tpu.memory_space<vmem>>, vector<16x4xf32>
    %cst_7 = arith.constant dense<0.000000e+00> : vector<16x512xf32>
    %11 = tpu.matmul %10, %9, %cst_7 {dimension_numbers = #tpu.dot_dimension_numbers<[1], [0], [0], [1], [0, 0, 1, 1], [], []>} : vector<16x4xf32>, vector<4x512xf32>, vector<16x512xf32> -> vector<16x512xf32>
    %12 = vector.broadcast %3 : vector<16x1xf32> to vector<16x512xf32>
    %13 = arith.addf %11, %12 : vector<16x512xf32>
    %cst_8 = arith.constant 0.000000e+00 : f32
    %14 = vector.broadcast %cst_8 : f32 to vector<16x512xf32>
    %15 = arith.maximumf %13, %14 : vector<16x512xf32>
    %c0_9 = arith.constant 0 : index
    %c0_10 = arith.constant 0 : index
    %16 = vector.load %arg4[%c0_9, %c0_10] : memref<72x16xf32, #tpu.memory_space<vmem>>, vector<72x16xf32>
    %cst_11 = arith.constant dense<0.000000e+00> : vector<72x512xf32>
    %17 = tpu.matmul %16, %15, %cst_11 {dimension_numbers = #tpu.dot_dimension_numbers<[1], [0], [0], [1], [0, 0, 1, 1], [], []>} : vector<72x16xf32>, vector<16x512xf32>, vector<72x512xf32> -> vector<72x512xf32>
    %c0_12 = arith.constant 0 : index
    %c0_13 = arith.constant 0 : index
    %18 = vector.load %arg5[%c0_12, %c0_13] : memref<72x512xf32, #tpu.memory_space<vmem>>, vector<72x512xf32>
    %19 = arith.mulf %17, %18 : vector<72x512xf32>
    %20 = vector.extract_strided_slice %19 {offsets = [32, 0], sizes = [8, 512], strides = [1, 1]} : vector<72x512xf32> to vector<8x512xf32>
    %21 = vector.extract_strided_slice %19 {offsets = [0, 0], sizes = [8, 512], strides = [1, 1]} : vector<72x512xf32> to vector<8x512xf32>
    %c17_i32 = arith.constant 17 : i32
    %22 = tpu.dynamic_rotate %21 by %c17_i32 dim 1 : vector<8x512xf32>, i32 -> vector<8x512xf32>
    %23 = arith.addf %20, %22 : vector<8x512xf32>
    %24 = vector.extract_strided_slice %19 {offsets = [8, 0], sizes = [8, 512], strides = [1, 1]} : vector<72x512xf32> to vector<8x512xf32>
    %c16_i32 = arith.constant 16 : i32
    %25 = tpu.dynamic_rotate %24 by %c16_i32 dim 1 : vector<8x512xf32>, i32 -> vector<8x512xf32>
    %26 = arith.addf %23, %25 : vector<8x512xf32>
    %27 = vector.extract_strided_slice %19 {offsets = [16, 0], sizes = [8, 512], strides = [1, 1]} : vector<72x512xf32> to vector<8x512xf32>
    %c15_i32 = arith.constant 15 : i32
    %28 = tpu.dynamic_rotate %27 by %c15_i32 dim 1 : vector<8x512xf32>, i32 -> vector<8x512xf32>
    %29 = arith.addf %26, %28 : vector<8x512xf32>
    %30 = vector.extract_strided_slice %19 {offsets = [24, 0], sizes = [8, 512], strides = [1, 1]} : vector<72x512xf32> to vector<8x512xf32>
    %c1_i32 = arith.constant 1 : i32
    %31 = tpu.dynamic_rotate %30 by %c1_i32 dim 1 : vector<8x512xf32>, i32 -> vector<8x512xf32>
    %32 = arith.addf %29, %31 : vector<8x512xf32>
    %33 = vector.extract_strided_slice %19 {offsets = [40, 0], sizes = [8, 512], strides = [1, 1]} : vector<72x512xf32> to vector<8x512xf32>
    %c511_i32 = arith.constant 511 : i32
    %34 = tpu.dynamic_rotate %33 by %c511_i32 dim 1 : vector<8x512xf32>, i32 -> vector<8x512xf32>
    %35 = arith.addf %32, %34 : vector<8x512xf32>
    %36 = vector.extract_strided_slice %19 {offsets = [48, 0], sizes = [8, 512], strides = [1, 1]} : vector<72x512xf32> to vector<8x512xf32>
    %c497_i32 = arith.constant 497 : i32
    %37 = tpu.dynamic_rotate %36 by %c497_i32 dim 1 : vector<8x512xf32>, i32 -> vector<8x512xf32>
    %38 = arith.addf %35, %37 : vector<8x512xf32>
    %39 = vector.extract_strided_slice %19 {offsets = [56, 0], sizes = [8, 512], strides = [1, 1]} : vector<72x512xf32> to vector<8x512xf32>
    %c496_i32 = arith.constant 496 : i32
    %40 = tpu.dynamic_rotate %39 by %c496_i32 dim 1 : vector<8x512xf32>, i32 -> vector<8x512xf32>
    %41 = arith.addf %38, %40 : vector<8x512xf32>
    %42 = vector.extract_strided_slice %19 {offsets = [64, 0], sizes = [8, 512], strides = [1, 1]} : vector<72x512xf32> to vector<8x512xf32>
    %c495_i32 = arith.constant 495 : i32
    %43 = tpu.dynamic_rotate %42 by %c495_i32 dim 1 : vector<8x512xf32>, i32 -> vector<8x512xf32>
    %44 = arith.addf %41, %43 : vector<8x512xf32>
    %c0_14 = arith.constant 0 : index
    %c0_15 = arith.constant 0 : index
    %45 = vector.load %arg6[%c0_14, %c0_15] : memref<8x512xf32, #tpu.memory_space<vmem>>, vector<4x512xf32>
    tpu.vector_store %arg6[%c0_14, %c0_15], %0 {strides = array<i32>} : memref<8x512xf32, #tpu.memory_space<vmem>>, vector<4x512xf32>,
    %46 = vector.extract_strided_slice %44 {offsets = [0, 0], sizes = [4, 512], strides = [1, 1]} : vector<8x512xf32> to vector<4x512xf32>
    %c4 = arith.constant 4 : index
    %c0_16 = arith.constant 0 : index
    %47 = vector.load %arg6[%c4, %c0_16] : memref<8x512xf32, #tpu.memory_space<vmem>>, vector<4x512xf32>
    tpu.vector_store %arg6[%c4, %c0_16], %46 {strides = array<i32>} : memref<8x512xf32, #tpu.memory_space<vmem>>, vector<4x512xf32>,
    return
  }
  func.func @transform_0(%arg0: i32) -> (i32, i32) {
    %c0_i32 = arith.constant 0 : i32
    %c0_i32_0 = arith.constant 0 : i32
    return %c0_i32, %arg0 : i32, i32
  }
  func.func @transform_1(%arg0: i32) -> (i32, i32) {
    %c0_i32 = arith.constant 0 : i32
    %c0_i32_0 = arith.constant 0 : i32
    %c0_i32_1 = arith.constant 0 : i32
    return %c0_i32, %c0_i32_0 : i32, i32
  }
  func.func @transform_2(%arg0: i32) -> (i32, i32) {
    %c0_i32 = arith.constant 0 : i32
    %c0_i32_0 = arith.constant 0 : i32
    %c0_i32_1 = arith.constant 0 : i32
    return %c0_i32, %c0_i32_0 : i32, i32
  }
  func.func @transform_3(%arg0: i32) -> (i32, i32) {
    %c0_i32 = arith.constant 0 : i32
    %c0_i32_0 = arith.constant 0 : i32
    %c0_i32_1 = arith.constant 0 : i32
    return %c0_i32, %c0_i32_0 : i32, i32
  }
  func.func @transform_4(%arg0: i32) -> (i32, i32) {
    %c0_i32 = arith.constant 0 : i32
    %c0_i32_0 = arith.constant 0 : i32
    %c0_i32_1 = arith.constant 0 : i32
    return %c0_i32, %c0_i32_0 : i32, i32
  }
  func.func @transform_5(%arg0: i32) -> (i32, i32) {
    %c0_i32 = arith.constant 0 : i32
    %c0_i32_0 = arith.constant 0 : i32
    return %c0_i32, %arg0 : i32, i32
  }
}

</mosaic_0001>

<llo_original>
// kernel: tpu_custom_call.1
$region0: #{tpu_custom_call.1}
  #allocation0 [shape = 'u32[]', space=smem, size = 0x4, offset = 0x4, fixed_abs, tag = 'smem constant byte address 0x4 - core index']
  #allocation1 [shape = 'u32[144,128]{1,0:T(1,128)}', space=vmem, size = 0x12000, scoped, tag = 'internal scratch']
  %s0 = inlined_call_operand.vmem [shape: f32[4,512], index: 0, kind: input, shape index: {}]
  %s1 = inlined_call_operand.vmem [shape: f32[16,3], index: 1, kind: input, shape index: {}]
  %s2 = inlined_call_operand.vmem [shape: f32[16,4], index: 2, kind: input, shape index: {}]
  %s3 = inlined_call_operand.vmem [shape: f32[72,16], index: 3, kind: input, shape index: {}]
  %s4 = inlined_call_operand.hbm [shape: f32[72,512], index: 4, kind: input, shape index: {}]
  %s5 = inlined_call_operand.hbm [shape: f32[8,512], index: 5, kind: output, shape index: {}]
  %s6 = sld [smem:[#allocation0]]
  $region34: #{tpu_custom_call.1} parent=0
    _
  %s8 = ssub.s32 1, %s6
  %s9 = scalar_select 0, %s8, %s6
  $region1: #{tpu_custom_call.1} parent=0
    #allocation2 [shape = 'u8[147456]{0}', space=vmem, size = 0x24000, scoped, tag = 'input window, operand 4, single buffered']
    #allocation3 [shape = 's32[1]{0}', space=sflag, size = 0x4, scoped, tag = 'scoped memory for tpu_custom_call.1']
    #allocation4 [shape = 's32[1]{0}', space=sflag, size = 0x4, scoped, tag = 'scoped memory for tpu_custom_call.1']
    #allocation5 [shape = 'u8[16384]{0}', space=vmem, size = 0x4000, scoped, tag = 'output window, operand 0, single buffered']
    %10 = vsyncpa [#allocation3], 0
    %11 = vsyncpa [#allocation4], 0
    // Predicated region
    $region2: #{tpu_custom_call.1} parent=1 // pred_check
      _
    $region3: #{tpu_custom_call.1} parent=1 // pred_check_branch
      %13 = sbr.rel (0) target = $region5
    $region4: #{tpu_custom_call.1} parent=1 // pred_region
      _
    $region5: #{tpu_custom_call.1} parent=1 // pred_fallthru
      _
    // Predicated region
    $region6: #{tpu_custom_call.1} parent=1 // pred_check
      _
    $region7: #{tpu_custom_call.1} parent=1 // pred_check_branch
      %15 = sbr.rel (0) target = $region9
    $region8: #{tpu_custom_call.1} parent=1 // pred_region
      _
    $region9: #{tpu_custom_call.1} parent=1 // pred_fallthru
      _
    // Predicated region
    $region10: #{tpu_custom_call.1} parent=1 // pred_check
      _
    $region11: #{tpu_custom_call.1} parent=1 // pred_check_branch
      %17 = sbr.rel (0) target = $region13
    $region12: #{tpu_custom_call.1} parent=1 // pred_region
      _
    $region13: #{tpu_custom_call.1} parent=1 // pred_fallthru
      _
    // Predicated region
    $region14: #{tpu_custom_call.1} parent=1 // pred_check
      _
    $region15: #{tpu_custom_call.1} parent=1 // pred_check_branch
      %19 = sbr.rel (0) target = $region17
    $region16: #{tpu_custom_call.1} parent=1 // pred_region
      _
    $region17: #{tpu_custom_call.1} parent=1 // pred_fallthru
      _
    // Predicated region
    $region18: #{tpu_custom_call.1} parent=1 // pred_check
      _
    $region19: #{tpu_custom_call.1} parent=1 // pred_check_branch
      %21 = sbr.rel (0) target = $region21
    $region20: #{tpu_custom_call.1} parent=1 // pred_region
      %s23 = ssub.s32 4608, 4608
      %24 = vsyncadd [#allocation3], %s23
      %s25 = sshll.u32 [#allocation2], 4
      %s26 = int_to_ptr.vmem [resolvable:$true] %s25
      %31 = dma.hbm_to_vmem [thread:$0]  %s4, 4608, %s26, [#allocation3], 512, 512, 32
    $region21: #{tpu_custom_call.1} parent=1 // pred_fallthru
      _
    // Predicated region
    $region22: #{tpu_custom_call.1} parent=1 // pred_check
      _
    $region23: #{tpu_custom_call.1} parent=1 // pred_check_branch
      %33 = sbr.rel (0) target = $region25
    $region24: #{tpu_custom_call.1} parent=1 // pred_region
      %34 = dma.done [#allocation3], 4608
    $region25: #{tpu_custom_call.1} parent=1 // pred_fallthru
      _
    %v35 = vld [vmem:[%s0] sm:$0xff]
    %v36 = vld [vmem:[%s0 + $0x8] sm:$0xff]
    %v37 = vld [vmem:[%s1] sm:$0xf]
    %v38 = vld [vmem:[%s1] sm:$0xff]
    %v39 = vld [vmem:[%s1 + $0x8] sm:$0xff]
    %41 = vset.pattern.permute.xlu0 0
    %42 = vperm.xlu0 %41, %v37
    %v43 = vpop.permute.xlu0 %42
    %v45 = vunpack.c.l.s4 839922192
    %v46 = vunpack.c.0.s8 %v45
    %v47 = vlaneseq
    %v48 = vshrl.u32 %v47, 7
    %v49 = vsub.s32 %v46, %v48
    %v50 = vrot.slane %v43, %v49
    %v52 = vmul.f32 %v35, %v50
    %v53 = vmul.f32 %v36, %v50
    %54 = vset.pattern.permute.xlu0 1
    %55 = vperm.xlu0 %54, %v37
    %v56 = vpop.permute.xlu0 %55
    %v58 = vunpack.c.l.s4 839922192
    %v59 = vunpack.c.0.s8 %v58
    %v60 = vlaneseq
    %v61 = vshrl.u32 %v60, 7
    %v62 = vsub.s32 %v59, %v61
    %v63 = vrot.slane %v56, %v62
    %v65 = vadd.f32 %v52, %v63
    %v66 = vadd.f32 %v53, %v63
    %v67 = vmax.f32 %v65, 0.0
    %v68 = vmax.f32 %v66, 0.0
    %v69 = vld [vmem:[%s2] sm:$0xff]
    %v70 = vld [vmem:[%s2 + $0x8] sm:$0xff]
    %72 = vset.pattern.permute.xlu0 2
    %73 = vperm.xlu0 %72, %v38
    %v74 = vpop.permute.xlu0 %73
    %77 = vset.pattern.permute.xlu0 2
    %78 = vperm.xlu0 %77, %v39
    %v79 = vpop.permute.xlu0 %78
    %v83 = vcombine.high %v67, %v67
    %v84 = vcombine.high %v68, %v68
    %vm85 = vcmask 31744
    %v87 = vsel %vm85, %v69, 0
    %v90 = vsel %vm85, %v70, 0
    %vm92 = vcmask 1043456
    %v93 = vsel %vm92, %v67, 0
    %v95 = vsel %vm92, %v83, 0
    %v97 = vsel %vm92, %v68, 0
    %v99 = vsel %vm92, %v84, 0
    %101 = vmatprep.subr.mxu0 %v95
    %102 = vmatpush1.msra.mxu0 %v93
    %103 = vmatprep.subr.mxu0 0.0
    %104 = vmatpush1.msra.mxu0 0.0
    %105 = vmatprep.subr.mxu0 0.0
    %106 = vmatpush1.msra.mxu0 0.0
    %107 = vmatprep.subr.mxu0 0.0
    %108 = vmatpush1.msra.mxu0 0.0
    %109 = vmatprep.subr.mxu0 0.0
    %110 = vmatpush1.msra.mxu0 0.0
    %111 = vmatprep.subr.mxu0 0.0
    %112 = vmatpush1.msra.mxu0 0.0
    %113 = vmatprep.subr.mxu0 0.0
    %114 = vmatpush1.msra.mxu0 0.0
    %115 = vmatprep.subr.mxu0 0.0
    %116 = vmatpush1.msra.mxu0 0.0
    %117 = vmatprep.subr.mxu0 0.0
    %118 = vmatpush1.msra.mxu0 0.0
    %119 = vmatprep.subr.mxu0 0.0
    %120 = vmatpush1.msra.mxu0 0.0
    %121 = vmatprep.subr.mxu0 0.0
    %122 = vmatpush1.msra.mxu0 0.0
    %123 = vmatprep.subr.mxu0 0.0
    %124 = vmatpush1.msra.mxu0 0.0
    %125 = vmatprep.subr.mxu0 0.0
    %126 = vmatpush1.msra.mxu0 0.0
    %127 = vmatprep.subr.mxu0 0.0
    %128 = vmatpush1.msra.mxu0 0.0
    %129 = vmatprep.subr.mxu0 0.0
    %130 = vmatpush1.msra.mxu0 0.0
    %131 = vmatprep.subr.mxu0 0.0
    %132 = vmatpush1.msra.mxu0 0.0
    %133 = vmatprep.subr.mxu0 0.0
    %134 = vmatpush1.msra.mxu0 0.0
    %135 = vmatprep.subr.mxu0 0.0
    %136 = vmatpush1.msra.mxu0 0.0
    %137 = vmatprep.subr.mxu0 0.0
    %138 = vmatpush1.msra.mxu0 0.0
    %139 = vmatprep.subr.mxu0 0.0
    %140 = vmatpush1.msra.mxu0 0.0
    %141 = vmatprep.subr.mxu0 0.0
    %142 = vmatpush1.msra.mxu0 0.0
    %143 = vmatprep.subr.mxu0 0.0
    %144 = vmatpush1.msra.mxu0 0.0
    %145 = vmatprep.subr.mxu0 0.0
    %146 = vmatpush1.msra.mxu0 0.0
    %147 = vmatprep.subr.mxu0 0.0
    %148 = vmatpush1.msra.mxu0 0.0
    %149 = vmatprep.subr.mxu0 0.0
    %150 = vmatpush1.msra.mxu0 0.0
    %151 = vmatprep.subr.mxu0 0.0
    %152 = vmatpush1.msra.mxu0 0.0
    %153 = vmatprep.subr.mxu0 0.0
    %154 = vmatpush1.msra.mxu0 0.0
    %155 = vmatprep.subr.mxu0 0.0
    %156 = vmatpush1.msra.mxu0 0.0
    %157 = vmatprep.subr.mxu0 0.0
    %158 = vmatpush1.msra.mxu0 0.0
    %159 = vmatprep.subr.mxu0 0.0
    %160 = vmatpush1.msra.mxu0 0.0
    %161 = vmatprep.subr.mxu0 0.0
    %162 = vmatpush1.msra.mxu0 0.0
    %163 = vmatprep.subr.mxu0 0.0
    %164 = vmatpush1.msra.mxu0 0.0
    %165 = vmatprep.mubr.f32.mxu0 0.0
    %166 = vmatmul.mubr.f32.gmra.mrb[0].mxu0 %v87
    %v167 = vpop.f32.mrb[0].mxu0
    %v168 = vadd.f32 %v74, %v167
    %v169 = vpop.f32.mrb[0].mxu0
    %v170 = vadd.f32 %v74, %v169
    %171 = vmatprep.mubr.f32.mxu0 0.0
    %172 = vmatmul.mubr.f32.gmra.mrb[0].mxu0 %v90
    %v173 = vpop.f32.mrb[0].mxu0
    %v174 = vadd.f32 %v79, %v173
    %v175 = vpop.f32.mrb[0].mxu0
    %v176 = vadd.f32 %v79, %v175
    %177 = vdwg.mxu0
    %178 = vmatprep.subr.mxu0 %v99
    %179 = vmatpush1.msra.mxu0 %v97
    %180 = vmatprep.subr.mxu0 0.0
    %181 = vmatpush1.msra.mxu0 0.0
    %182 = vmatprep.subr.mxu0 0.0
    %183 = vmatpush1.msra.mxu0 0.0
    %184 = vmatprep.subr.mxu0 0.0
    %185 = vmatpush1.msra.mxu0 0.0
    %186 = vmatprep.subr.mxu0 0.0
    %187 = vmatpush1.msra.mxu0 0.0
    %188 = vmatprep.subr.mxu0 0.0
    %189 = vmatpush1.msra.mxu0 0.0
    %190 = vmatprep.subr.mxu0 0.0
    %191 = vmatpush1.msra.mxu0 0.0
    %192 = vmatprep.subr.mxu0 0.0
    %193 = vmatpush1.msra.mxu0 0.0
    %194 = vmatprep.subr.mxu0 0.0
    %195 = vmatpush1.msra.mxu0 0.0
    %196 = vmatprep.subr.mxu0 0.0
    %197 = vmatpush1.msra.mxu0 0.0
    %198 = vmatprep.subr.mxu0 0.0
    %199 = vmatpush1.msra.mxu0 0.0
    %200 = vmatprep.subr.mxu0 0.0
    %201 = vmatpush1.msra.mxu0 0.0
    %202 = vmatprep.subr.mxu0 0.0
    %203 = vmatpush1.msra.mxu0 0.0
    %204 = vmatprep.subr.mxu0 0.0
    %205 = vmatpush1.msra.mxu0 0.0
    %206 = vmatprep.subr.mxu0 0.0
    %207 = vmatpush1.msra.mxu0 0.0
    %208 = vmatprep.subr.mxu0 0.0
    %209 = vmatpush1.msra.mxu0 0.0
    %210 = vmatprep.subr.mxu0 0.0
    %211 = vmatpush1.msra.mxu0 0.0
    %212 = vmatprep.subr.mxu0 0.0
    %213 = vmatpush1.msra.mxu0 0.0
    %214 = vmatprep.subr.mxu0 0.0
    %215 = vmatpush1.msra.mxu0 0.0
    %216 = vmatprep.subr.mxu0 0.0
    %217 = vmatpush1.msra.mxu0 0.0
    %218 = vmatprep.subr.mxu0 0.0
    %219 = vmatpush1.msra.mxu0 0.0
    %220 = vmatprep.subr.mxu0 0.0
    %221 = vmatpush1.msra.mxu0 0.0
    %222 = vmatprep.subr.mxu0 0.0
    %223 = vmatpush1.msra.mxu0 0.0
    %224 = vmatprep.subr.mxu0 0.0
    %225 = vmatpush1.msra.mxu0 0.0
    %226 = vmatprep.subr.mxu0 0.0
    %227 = vmatpush1.msra.mxu0 0.0
    %228 = vmatprep.subr.mxu0 0.0
    %229 = vmatpush1.msra.mxu0 0.0
    %230 = vmatprep.subr.mxu0 0.0
    %231 = vmatpush1.msra.mxu0 0.0
    %232 = vmatprep.subr.mxu0 0.0
    %233 = vmatpush1.msra.mxu0 0.0
    %234 = vmatprep.subr.mxu0 0.0
    %235 = vmatpush1.msra.mxu0 0.0
    %236 = vmatprep.subr.mxu0 0.0
    %237 = vmatpush1.msra.mxu0 0.0
    %238 = vmatprep.subr.mxu0 0.0
    %239 = vmatpush1.msra.mxu0 0.0
    %240 = vmatprep.subr.mxu0 0.0
    %241 = vmatpush1.msra.mxu0 0.0
    %242 = vmatprep.mubr.f32.mxu0 0.0
    %243 = vmatmul.mubr.f32.gmra.mrb[0].mxu0 %v87
    %v244 = vpop.f32.mrb[0].mxu0
    %v245 = vadd.f32 %v74, %v244
    %v246 = vpop.f32.mrb[0].mxu0
    %v247 = vadd.f32 %v74, %v246
    %248 = vmatprep.mubr.f32.mxu0 0.0
    %249 = vmatmul.mubr.f32.gmra.mrb[0].mxu0 %v90
    %v250 = vpop.f32.mrb[0].mxu0
    %v251 = vadd.f32 %v79, %v250
    %v252 = vpop.f32.mrb[0].mxu0
    %v253 = vadd.f32 %v79, %v252
    %254 = vdwg.mxu0
    %v255 = vmax.f32 %v168, 0.0
    %v256 = vmax.f32 %v170, 0.0
    %v257 = vmax.f32 %v245, 0.0
    %v258 = vmax.f32 %v247, 0.0
    %v259 = vmax.f32 %v174, 0.0
    %v260 = vmax.f32 %v176, 0.0
    %v261 = vmax.f32 %v251, 0.0
    %v262 = vmax.f32 %v253, 0.0
    %v263 = vld [vmem:[%s3] sm:$0xff]
    %v264 = vld [vmem:[%s3 + $0x8] sm:$0xff]
    %v265 = vld [vmem:[%s3 + $0x10] sm:$0xff]
    %v266 = vld [vmem:[%s3 + $0x18] sm:$0xff]
    %v267 = vld [vmem:[%s3 + $0x20] sm:$0xff]
    %v268 = vld [vmem:[%s3 + $0x28] sm:$0xff]
    %v269 = vld [vmem:[%s3 + $0x30] sm:$0xff]
    %v270 = vld [vmem:[%s3 + $0x38] sm:$0xff]
    %v271 = vld [vmem:[%s3 + $0x40] sm:$0xff]
    %vm272 = vcmask 130048
    %v274 = vsel %vm272, %v263, 0
    %v277 = vsel %vm272, %v264, 0
    %v280 = vsel %vm272, %v265, 0
    %v283 = vsel %vm272, %v266, 0
    %v286 = vsel %vm272, %v267, 0
    %v289 = vsel %vm272, %v268, 0
    %v292 = vsel %vm272, %v269, 0
    %v295 = vsel %vm272, %v270, 0
    %v298 = vsel %vm272, %v271, 0
    %300 = vmatprep.subr.mxu0 %v256
    %301 = vmatpush1.msra.mxu0 %v255
    %302 = vmatprep.subr.mxu0 %v260
    %303 = vmatpush1.msra.mxu0 %v259
    %304 = vmatprep.subr.mxu0 0.0
    %305 = vmatpush1.msra.mxu0 0.0
    %306 = vmatprep.subr.mxu0 0.0
    %307 = vmatpush1.msra.mxu0 0.0
    %308 = vmatprep.subr.mxu0 0.0
    %309 = vmatpush1.msra.mxu0 0.0
    %310 = vmatprep.subr.mxu0 0.0
    %311 = vmatpush1.msra.mxu0 0.0
    %312 = vmatprep.subr.mxu0 0.0
    %313 = vmatpush1.msra.mxu0 0.0
    %314 = vmatprep.subr.mxu0 0.0
    %315 = vmatpush1.msra.mxu0 0.0
    %316 = vmatprep.subr.mxu0 0.0
    %317 = vmatpush1.msra.mxu0 0.0
    %318 = vmatprep.subr.mxu0 0.0
    %319 = vmatpush1.msra.mxu0 0.0
    %320 = vmatprep.subr.mxu0 0.0
    %321 = vmatpush1.msra.mxu0 0.0
    %322 = vmatprep.subr.mxu0 0.0
    %323 = vmatpush1.msra.mxu0 0.0
    %324 = vmatprep.subr.mxu0 0.0
    %325 = vmatpush1.msra.mxu0 0.0
    %326 = vmatprep.subr.mxu0 0.0
    %327 = vmatpush1.msra.mxu0 0.0
    %328 = vmatprep.subr.mxu0 0.0
    %329 = vmatpush1.msra.mxu0 0.0
    %330 = vmatprep.subr.mxu0 0.0
    %331 = vmatpush1.msra.mxu0 0.0
    %332 = vmatprep.subr.mxu0 0.0
    %333 = vmatpush1.msra.mxu0 0.0
    %334 = vmatprep.subr.mxu0 0.0
    %335 = vmatpush1.msra.mxu0 0.0
    %336 = vmatprep.subr.mxu0 0.0
    %337 = vmatpush1.msra.mxu0 0.0
    %338 = vmatprep.subr.mxu0 0.0
    %339 = vmatpush1.msra.mxu0 0.0
    %340 = vmatprep.subr.mxu0 0.0
    %341 = vmatpush1.msra.mxu0 0.0
    %342 = vmatprep.subr.mxu0 0.0
    %343 = vmatpush1.msra.mxu0 0.0
    %344 = vmatprep.subr.mxu0 0.0
    %345 = vmatpush1.msra.mxu0 0.0
    %346 = vmatprep.subr.mxu0 0.0
    %347 = vmatpush1.msra.mxu0 0.0
    %348 = vmatprep.subr.mxu0 0.0
    %349 = vmatpush1.msra.mxu0 0.0
    %350 = vmatprep.subr.mxu0 0.0
    %351 = vmatpush1.msra.mxu0 0.0
    %352 = vmatprep.subr.mxu0 0.0
    %353 = vmatpush1.msra.mxu0 0.0
    %354 = vmatprep.subr.mxu0 0.0
    %355 = vmatpush1.msra.mxu0 0.0
    %356 = vmatprep.subr.mxu0 0.0
    %357 = vmatpush1.msra.mxu0 0.0
    %358 = vmatprep.subr.mxu0 0.0
    %359 = vmatpush1.msra.mxu0 0.0
    %360 = vmatprep.subr.mxu0 0.0
    %361 = vmatpush1.msra.mxu0 0.0
    %362 = vmatprep.subr.mxu0 0.0
    %363 = vmatpush1.msra.mxu0 0.0
    %364 = vmatprep.mubr.f32.mxu0 0.0
    %365 = vmatmul.mubr.f32.gmra.mrb[0].mxu0 %v274
    %v366 = vpop.f32.mrb[0].mxu0
    %v367 = vadd.f32 0.0, %v366
    %v368 = vpop.f32.mrb[0].mxu0
    %v369 = vadd.f32 0.0, %v368
    %370 = vmatprep.mubr.f32.mxu0 0.0
    %371 = vmatmul.mubr.f32.gmra.mrb[0].mxu0 %v277
    %v372 = vpop.f32.mrb[0].mxu0
    %v373 = vadd.f32 0.0, %v372
    %v374 = vpop.f32.mrb[0].mxu0
    %v375 = vadd.f32 0.0, %v374
    %376 = vmatprep.mubr.f32.mxu0 0.0
    %377 = vmatmul.mubr.f32.gmra.mrb[0].mxu0 %v280
    %v378 = vpop.f32.mrb[0].mxu0
    %v379 = vadd.f32 0.0, %v378
    %v380 = vpop.f32.mrb[0].mxu0
    %v381 = vadd.f32 0.0, %v380
    %382 = vmatprep.mubr.f32.mxu0 0.0
    %383 = vmatmul.mubr.f32.gmra.mrb[0].mxu0 %v283
    %v384 = vpop.f32.mrb[0].mxu0
    %v385 = vadd.f32 0.0, %v384
    %v386 = vpop.f32.mrb[0].mxu0
    %v387 = vadd.f32 0.0, %v386
    %388 = vmatprep.mubr.f32.mxu0 0.0
    %389 = vmatmul.mubr.f32.gmra.mrb[0].mxu0 %v286
    %v390 = vpop.f32.mrb[0].mxu0
    %v391 = vadd.f32 0.0, %v390
    %v392 = vpop.f32.mrb[0].mxu0
    %v393 = vadd.f32 0.0, %v392
    %394 = vmatprep.mubr.f32.mxu0 0.0
    %395 = vmatmul.mubr.f32.gmra.mrb[0].mxu0 %v289
    %v396 = vpop.f32.mrb[0].mxu0
    %v397 = vadd.f32 0.0, %v396
    %v398 = vpop.f32.mrb[0].mxu0
    %v399 = vadd.f32 0.0, %v398
    %400 = vmatprep.mubr.f32.mxu0 0.0
    %401 = vmatmul.mubr.f32.gmra.mrb[0].mxu0 %v292
    %v402 = vpop.f32.mrb[0].mxu0
    %v403 = vadd.f32 0.0, %v402
    %v404 = vpop.f32.mrb[0].mxu0
    %v405 = vadd.f32 0.0, %v404
    %406 = vmatprep.mubr.f32.mxu0 0.0
    %407 = vmatmul.mubr.f32.gmra.mrb[0].mxu0 %v295
    %v408 = vpop.f32.mrb[0].mxu0
    %v409 = vadd.f32 0.0, %v408
    %v410 = vpop.f32.mrb[0].mxu0
    %v411 = vadd.f32 0.0, %v410
    %412 = vmatprep.mubr.f32.mxu0 0.0
    %413 = vmatmul.mubr.f32.gmra.mrb[0].mxu0 %v298
    %v414 = vpop.f32.mrb[0].mxu0
    %v415 = vadd.f32 0.0, %v414
    %v416 = vpop.f32.mrb[0].mxu0
    %v417 = vadd.f32 0.0, %v416
    %418 = vdwg.mxu0
    %419 = vmatprep.subr.mxu0 %v258
    %420 = vmatpush1.msra.mxu0 %v257
    %421 = vmatprep.subr.mxu0 %v262
    %422 = vmatpush1.msra.mxu0 %v261
    %423 = vmatprep.subr.mxu0 0.0
    %424 = vmatpush1.msra.mxu0 0.0
    %425 = vmatprep.subr.mxu0 0.0
    %426 = vmatpush1.msra.mxu0 0.0
    %427 = vmatprep.subr.mxu0 0.0
    %428 = vmatpush1.msra.mxu0 0.0
    %429 = vmatprep.subr.mxu0 0.0
    %430 = vmatpush1.msra.mxu0 0.0
    %431 = vmatprep.subr.mxu0 0.0
    %432 = vmatpush1.msra.mxu0 0.0
    %433 = vmatprep.subr.mxu0 0.0
    %434 = vmatpush1.msra.mxu0 0.0
    %435 = vmatprep.subr.mxu0 0.0
    %436 = vmatpush1.msra.mxu0 0.0
    %437 = vmatprep.subr.mxu0 0.0
    %438 = vmatpush1.msra.mxu0 0.0
    %439 = vmatprep.subr.mxu0 0.0
    %440 = vmatpush1.msra.mxu0 0.0
    %441 = vmatprep.subr.mxu0 0.0
    %442 = vmatpush1.msra.mxu0 0.0
    %443 = vmatprep.subr.mxu0 0.0
    %444 = vmatpush1.msra.mxu0 0.0
    %445 = vmatprep.subr.mxu0 0.0
    %446 = vmatpush1.msra.mxu0 0.0
    %447 = vmatprep.subr.mxu0 0.0
    %448 = vmatpush1.msra.mxu0 0.0
    %449 = vmatprep.subr.mxu0 0.0
    %450 = vmatpush1.msra.mxu0 0.0
    %451 = vmatprep.subr.mxu0 0.0
    %452 = vmatpush1.msra.mxu0 0.0
    %453 = vmatprep.subr.mxu0 0.0
    %454 = vmatpush1.msra.mxu0 0.0
    %455 = vmatprep.subr.mxu0 0.0
    %456 = vmatpush1.msra.mxu0 0.0
    %457 = vmatprep.subr.mxu0 0.0
    %458 = vmatpush1.msra.mxu0 0.0
    %459 = vmatprep.subr.mxu0 0.0
    %460 = vmatpush1.msra.mxu0 0.0
    %461 = vmatprep.subr.mxu0 0.0
    %462 = vmatpush1.msra.mxu0 0.0
    %463 = vmatprep.subr.mxu0 0.0
    %464 = vmatpush1.msra.mxu0 0.0
    %465 = vmatprep.subr.mxu0 0.0
    %466 = vmatpush1.msra.mxu0 0.0
    %467 = vmatprep.subr.mxu0 0.0
    %468 = vmatpush1.msra.mxu0 0.0
    %469 = vmatprep.subr.mxu0 0.0
    %470 = vmatpush1.msra.mxu0 0.0
    %471 = vmatprep.subr.mxu0 0.0
    %472 = vmatpush1.msra.mxu0 0.0
    %473 = vmatprep.subr.mxu0 0.0
    %474 = vmatpush1.msra.mxu0 0.0
    %475 = vmatprep.subr.mxu0 0.0
    %476 = vmatpush1.msra.mxu0 0.0
    %477 = vmatprep.subr.mxu0 0.0
    %478 = vmatpush1.msra.mxu0 0.0
    %479 = vmatprep.subr.mxu0 0.0
    %480 = vmatpush1.msra.mxu0 0.0
    %481 = vmatprep.subr.mxu0 0.0
    %482 = vmatpush1.msra.mxu0 0.0
    %483 = vmatprep.mubr.f32.mxu0 0.0
    %484 = vmatmul.mubr.f32.gmra.mrb[0].mxu0 %v274
    %v485 = vpop.f32.mrb[0].mxu0
    %v486 = vadd.f32 0.0, %v485
    %v487 = vpop.f32.mrb[0].mxu0
    %v488 = vadd.f32 0.0, %v487
    %489 = vmatprep.mubr.f32.mxu0 0.0
    %490 = vmatmul.mubr.f32.gmra.mrb[0].mxu0 %v277
    %v491 = vpop.f32.mrb[0].mxu0
    %v492 = vadd.f32 0.0, %v491
    %v493 = vpop.f32.mrb[0].mxu0
    %v494 = vadd.f32 0.0, %v493
    %495 = vmatprep.mubr.f32.mxu0 0.0
    %496 = vmatmul.mubr.f32.gmra.mrb[0].mxu0 %v280
    %v497 = vpop.f32.mrb[0].mxu0
    %v498 = vadd.f32 0.0, %v497
    %v499 = vpop.f32.mrb[0].mxu0
    %v500 = vadd.f32 0.0, %v499
    %501 = vmatprep.mubr.f32.mxu0 0.0
    %502 = vmatmul.mubr.f32.gmra.mrb[0].mxu0 %v283
    %v503 = vpop.f32.mrb[0].mxu0
    %v504 = vadd.f32 0.0, %v503
    %v505 = vpop.f32.mrb[0].mxu0
    %v506 = vadd.f32 0.0, %v505
    %507 = vmatprep.mubr.f32.mxu0 0.0
    %508 = vmatmul.mubr.f32.gmra.mrb[0].mxu0 %v286
    %v509 = vpop.f32.mrb[0].mxu0
    %v510 = vadd.f32 0.0, %v509
    %v511 = vpop.f32.mrb[0].mxu0
    %v512 = vadd.f32 0.0, %v511
    %513 = vmatprep.mubr.f32.mxu0 0.0
    %514 = vmatmul.mubr.f32.gmra.mrb[0].mxu0 %v289
    %v515 = vpop.f32.mrb[0].mxu0
    %v516 = vadd.f32 0.0, %v515
    %v517 = vpop.f32.mrb[0].mxu0
    %v518 = vadd.f32 0.0, %v517
    %519 = vmatprep.mubr.f32.mxu0 0.0
    %520 = vmatmul.mubr.f32.gmra.mrb[0].mxu0 %v292
    %v521 = vpop.f32.mrb[0].mxu0
    %v522 = vadd.f32 0.0, %v521
    %v523 = vpop.f32.mrb[0].mxu0
    %v524 = vadd.f32 0.0, %v523
    %525 = vmatprep.mubr.f32.mxu0 0.0
    %526 = vmatmul.mubr.f32.gmra.mrb[0].mxu0 %v295
    %v527 = vpop.f32.mrb[0].mxu0
    %v528 = vadd.f32 0.0, %v527
    %v529 = vpop.f32.mrb[0].mxu0
    %v530 = vadd.f32 0.0, %v529
    %531 = vmatprep.mubr.f32.mxu0 0.0
    %532 = vmatmul.mubr.f32.gmra.mrb[0].mxu0 %v298
    %v533 = vpop.f32.mrb[0].mxu0
    %v534 = vadd.f32 0.0, %v533
    %v535 = vpop.f32.mrb[0].mxu0
    %v536 = vadd.f32 0.0, %v535
    %537 = vdwg.mxu0
    %v538 = vld [vmem:[#allocation2] sm:$0xff]
    %v539 = vld [vmem:[#allocation2 + $0x8] sm:$0xff]
    %v540 = vld [vmem:[#allocation2 + $0x10] sm:$0xff]
    %v541 = vld [vmem:[#allocation2 + $0x18] sm:$0xff]
    %v542 = vld [vmem:[#allocation2 + $0x20] sm:$0xff]
    %v543 = vld [vmem:[#allocation2 + $0x28] sm:$0xff]
    %v544 = vld [vmem:[#allocation2 + $0x30] sm:$0xff]
    %v545 = vld [vmem:[#allocation2 + $0x38] sm:$0xff]
    %v546 = vld [vmem:[#allocation2 + $0x40] sm:$0xff]
    %v547 = vld [vmem:[#allocation2 + $0x48] sm:$0xff]
    %v548 = vld [vmem:[#allocation2 + $0x50] sm:$0xff]
    %v549 = vld [vmem:[#allocation2 + $0x58] sm:$0xff]
    %v550 = vld [vmem:[#allocation2 + $0x60] sm:$0xff]
    %v551 = vld [vmem:[#allocation2 + $0x68] sm:$0xff]
    %v552 = vld [vmem:[#allocation2 + $0x70] sm:$0xff]
    %v553 = vld [vmem:[#allocation2 + $0x78] sm:$0xff]
    %v554 = vld [vmem:[#allocation2 + $0x80] sm:$0xff]
    %v555 = vld [vmem:[#allocation2 + $0x88] sm:$0xff]
    %v556 = vld [vmem:[#allocation2 + $0x90] sm:$0xff]
    %v557 = vld [vmem:[#allocation2 + $0x98] sm:$0xff]
    %v558 = vld [vmem:[#allocation2 + $0xa0] sm:$0xff]
    %v559 = vld [vmem:[#allocation2 + $0xa8] sm:$0xff]
    %v560 = vld [vmem:[#allocation2 + $0xb0] sm:$0xff]
    %v561 = vld [vmem:[#allocation2 + $0xb8] sm:$0xff]
    %v562 = vld [vmem:[#allocation2 + $0xc0] sm:$0xff]
    %v563 = vld [vmem:[#allocation2 + $0xc8] sm:$0xff]
    %v564 = vld [vmem:[#allocation2 + $0xd0] sm:$0xff]
    %v565 = vld [vmem:[#allocation2 + $0xd8] sm:$0xff]
    %v566 = vld [vmem:[#allocation2 + $0xe0] sm:$0xff]
    %v567 = vld [vmem:[#allocation2 + $0xe8] sm:$0xff]
    %v568 = vld [vmem:[#allocation2 + $0xf0] sm:$0xff]
    %v569 = vld [vmem:[#allocation2 + $0xf8] sm:$0xff]
    %v570 = vld [vmem:[#allocation2 + $0x100] sm:$0xff]
    %v571 = vld [vmem:[#allocation2 + $0x108] sm:$0xff]
    %v572 = vld [vmem:[#allocation2 + $0x110] sm:$0xff]
    %v573 = vld [vmem:[#allocation2 + $0x118] sm:$0xff]
    %v574 = vmul.f32 %v367, %v538
    %v575 = vmul.f32 %v369, %v539
    %v576 = vmul.f32 %v486, %v540
    %v577 = vmul.f32 %v488, %v541
    %v578 = vmul.f32 %v373, %v542
    %v579 = vmul.f32 %v375, %v543
    %v580 = vmul.f32 %v492, %v544
    %v581 = vmul.f32 %v494, %v545
    %v582 = vmul.f32 %v379, %v546
    %v583 = vmul.f32 %v381, %v547
    %v584 = vmul.f32 %v498, %v548
    %v585 = vmul.f32 %v500, %v549
    %v586 = vmul.f32 %v385, %v550
    %v587 = vmul.f32 %v387, %v551
    %v588 = vmul.f32 %v504, %v552
    %v589 = vmul.f32 %v506, %v553
    %v590 = vmul.f32 %v391, %v554
    %v591 = vmul.f32 %v393, %v555
    %v592 = vmul.f32 %v510, %v556
    %v593 = vmul.f32 %v512, %v557
    %v594 = vmul.f32 %v397, %v558
    %v595 = vmul.f32 %v399, %v559
    %v596 = vmul.f32 %v516, %v560
    %v597 = vmul.f32 %v518, %v561
    %v598 = vmul.f32 %v403, %v562
    %v599 = vmul.f32 %v405, %v563
    %v600 = vmul.f32 %v522, %v564
    %v601 = vmul.f32 %v524, %v565
    %v602 = vmul.f32 %v409, %v566
    %v603 = vmul.f32 %v411, %v567
    %v604 = vmul.f32 %v528, %v568
    %v605 = vmul.f32 %v530, %v569
    %v606 = vmul.f32 %v415, %v570
    %v607 = vmul.f32 %v417, %v571
    %v608 = vmul.f32 %v534, %v572
    %v609 = vmul.f32 %v536, %v573
    %610 = vrot.lane.b32.xlu0 %v574, 17
    %v611 = vpop.permute.xlu0 %610
    %612 = vrot.lane.b32.xlu0 %v575, 17
    %v613 = vpop.permute.xlu0 %612
    %614 = vrot.lane.b32.xlu0 %v576, 17
    %v615 = vpop.permute.xlu0 %614
    %616 = vrot.lane.b32.xlu0 %v577, 17
    %v617 = vpop.permute.xlu0 %616
    %v618 = vlaneseq
    %v619 = vand.u32 %v618, 127
    %vm620 = vcmp.lt.s32.totalorder %v619, 17
    %v621 = vsel %vm620, %v615, %v617
    %v622 = vsel %vm620, %v613, %v615
    %v623 = vsel %vm620, %v611, %v613
    %v624 = vsel %vm620, %v617, %v611
    %v625 = vadd.f32 %v590, %v624
    %v626 = vadd.f32 %v591, %v623
    %v627 = vadd.f32 %v592, %v622
    %v628 = vadd.f32 %v593, %v621
    %629 = vrot.lane.b32.xlu0 %v578, 16
    %v630 = vpop.permute.xlu0 %629
    %631 = vrot.lane.b32.xlu0 %v579, 16
    %v632 = vpop.permute.xlu0 %631
    %633 = vrot.lane.b32.xlu0 %v580, 16
    %v634 = vpop.permute.xlu0 %633
    %635 = vrot.lane.b32.xlu0 %v581, 16
    %v636 = vpop.permute.xlu0 %635
    %vm637 = vcmp.lt.s32.totalorder %v619, 16
    %v638 = vsel %vm637, %v634, %v636
    %v639 = vsel %vm637, %v632, %v634
    %v640 = vsel %vm637, %v630, %v632
    %v641 = vsel %vm637, %v636, %v630
    %v642 = vadd.f32 %v625, %v641
    %v643 = vadd.f32 %v626, %v640
    %v644 = vadd.f32 %v627, %v639
    %v645 = vadd.f32 %v628, %v638
    %646 = vrot.lane.b32.xlu0 %v582, 15
    %v647 = vpop.permute.xlu0 %646
    %648 = vrot.lane.b32.xlu0 %v583, 15
    %v649 = vpop.permute.xlu0 %648
    %650 = vrot.lane.b32.xlu0 %v584, 15
    %v651 = vpop.permute.xlu0 %650
    %652 = vrot.lane.b32.xlu0 %v585, 15
    %v653 = vpop.permute.xlu0 %652
    %vm654 = vcmp.lt.s32.totalorder %v619, 15
    %v655 = vsel %vm654, %v651, %v653
    %v656 = vsel %vm654, %v649, %v651
    %v657 = vsel %vm654, %v647, %v649
    %v658 = vsel %vm654, %v653, %v647
    %v659 = vadd.f32 %v642, %v658
    %v660 = vadd.f32 %v643, %v657
    %v661 = vadd.f32 %v644, %v656
    %v662 = vadd.f32 %v645, %v655
    %663 = vrot.lane.b32.xlu0 %v586, 1
    %v664 = vpop.permute.xlu0 %663
    %665 = vrot.lane.b32.xlu0 %v587, 1
    %v666 = vpop.permute.xlu0 %665
    %667 = vrot.lane.b32.xlu0 %v588, 1
    %v668 = vpop.permute.xlu0 %667
    %669 = vrot.lane.b32.xlu0 %v589, 1
    %v670 = vpop.permute.xlu0 %669
    %vm671 = vcmp.lt.s32.totalorder %v619, 1
    %v672 = vsel %vm671, %v668, %v670
    %v673 = vsel %vm671, %v666, %v668
    %v674 = vsel %vm671, %v664, %v666
    %v675 = vsel %vm671, %v670, %v664
    %v676 = vadd.f32 %v659, %v675
    %v677 = vadd.f32 %v660, %v674
    %v678 = vadd.f32 %v661, %v673
    %v679 = vadd.f32 %v662, %v672
    %680 = vrot.lane.b32.xlu0 %v594, 127
    %v681 = vpop.permute.xlu0 %680
    %682 = vrot.lane.b32.xlu0 %v595, 127
    %v683 = vpop.permute.xlu0 %682
    %684 = vrot.lane.b32.xlu0 %v596, 127
    %v685 = vpop.permute.xlu0 %684
    %686 = vrot.lane.b32.xlu0 %v597, 127
    %v687 = vpop.permute.xlu0 %686
    %vm688 = vcmp.lt.s32.totalorder %v619, 127
    %v689 = vsel %vm688, %v685, %v687
    %v690 = vsel %vm688, %v683, %v685
    %v691 = vsel %vm688, %v681, %v683
    %v692 = vsel %vm688, %v687, %v681
    %v693 = vadd.f32 %v676, %v691
    %v694 = vadd.f32 %v677, %v690
    %v695 = vadd.f32 %v678, %v689
    %v696 = vadd.f32 %v679, %v692
    %697 = vrot.lane.b32.xlu0 %v598, 113
    %v698 = vpop.permute.xlu0 %697
    %699 = vrot.lane.b32.xlu0 %v599, 113
    %v700 = vpop.permute.xlu0 %699
    %701 = vrot.lane.b32.xlu0 %v600, 113
    %v702 = vpop.permute.xlu0 %701
    %703 = vrot.lane.b32.xlu0 %v601, 113
    %v704 = vpop.permute.xlu0 %703
    %vm705 = vcmp.lt.s32.totalorder %v619, 113
    %v706 = vsel %vm705, %v702, %v704
    %v707 = vsel %vm705, %v700, %v702
    %v708 = vsel %vm705, %v698, %v700
    %v709 = vsel %vm705, %v704, %v698
    %v710 = vadd.f32 %v693, %v708
    %v711 = vadd.f32 %v694, %v707
    %v712 = vadd.f32 %v695, %v706
    %v713 = vadd.f32 %v696, %v709
    %714 = vrot.lane.b32.xlu0 %v602, 112
    %v715 = vpop.permute.xlu0 %714
    %716 = vrot.lane.b32.xlu0 %v603, 112
    %v717 = vpop.permute.xlu0 %716
    %718 = vrot.lane.b32.xlu0 %v604, 112
    %v719 = vpop.permute.xlu0 %718
    %720 = vrot.lane.b32.xlu0 %v605, 112
    %v721 = vpop.permute.xlu0 %720
    %vm722 = vcmp.lt.s32.totalorder %v619, 112
    %v723 = vsel %vm722, %v719, %v721
    %v724 = vsel %vm722, %v717, %v719
    %v725 = vsel %vm722, %v715, %v717
    %v726 = vsel %vm722, %v721, %v715
    %v727 = vadd.f32 %v710, %v725
    %v728 = vadd.f32 %v711, %v724
    %v729 = vadd.f32 %v712, %v723
    %v730 = vadd.f32 %v713, %v726
    %731 = vrot.lane.b32.xlu0 %v606, 111
    %v732 = vpop.permute.xlu0 %731
    %733 = vrot.lane.b32.xlu0 %v607, 111
    %v734 = vpop.permute.xlu0 %733
    %735 = vrot.lane.b32.xlu0 %v608, 111
    %v736 = vpop.permute.xlu0 %735
    %737 = vrot.lane.b32.xlu0 %v609, 111
    %v738 = vpop.permute.xlu0 %737
    %vm739 = vcmp.lt.s32.totalorder %v619, 111
    %v740 = vsel %vm739, %v736, %v738
    %v741 = vsel %vm739, %v734, %v736
    %v742 = vsel %vm739, %v732, %v734
    %v743 = vsel %vm739, %v738, %v732
    %v744 = vadd.f32 %v727, %v742
    %v745 = vadd.f32 %v728, %v741
    %v746 = vadd.f32 %v729, %v740
    %v747 = vadd.f32 %v730, %v743
    %v750 = vcombine.high %v35, %v35
    %v751 = vcombine.high %v36, %v36
    %754 = vst [vmem:[#allocation5] sm:$0xf] %v35
    %755 = vst [vmem:[#allocation5 + $0x8] sm:$0xf] %v750
    %756 = vst [vmem:[#allocation5 + $0x10] sm:$0xf] %v36
    %757 = vst [vmem:[#allocation5 + $0x18] sm:$0xf] %v751
    %v762 = vrot.slane %v744, 4
    %v763 = vrot.slane %v745, 4
    %v764 = vrot.slane %v746, 4
    %v765 = vrot.slane %v747, 4
    %770 = vst [vmem:[#allocation5] sm:$0xf0] %v762
    %771 = vst [vmem:[#allocation5 + $0x8] sm:$0xf0] %v763
    %772 = vst [vmem:[#allocation5 + $0x10] sm:$0xf0] %v764
    %773 = vst [vmem:[#allocation5 + $0x18] sm:$0xf0] %v765
    // Predicated region
    $region26: #{tpu_custom_call.1} parent=1 // pred_check
      _
    $region27: #{tpu_custom_call.1} parent=1 // pred_check_branch
      %775 = sbr.rel (0) target = $region29
    $region28: #{tpu_custom_call.1} parent=1 // pred_region
      %s777 = ssub.s32 512, 512
      %778 = vsyncadd [#allocation4], %s777
      %s780 = sshll.u32 [#allocation5], 4
      %s781 = int_to_ptr.vmem [resolvable:$true] %s780
      %783 = dma.vmem_to_hbm [thread:$0]  %s781, 512, %s5, [#allocation4]
    $region29: #{tpu_custom_call.1} parent=1 // pred_fallthru
      _
    // Predicated region
    $region30: #{tpu_custom_call.1} parent=1 // pred_check
      _
    $region31: #{tpu_custom_call.1} parent=1 // pred_check_branch
      %785 = sbr.rel (0) target = $region33
    $region32: #{tpu_custom_call.1} parent=1 // pred_region
      %786 = dma.done [#allocation4], 512
    $region33: #{tpu_custom_call.1} parent=1 // pred_fallthru
      _
    %787 = vsyncpa [#allocation3], 1
    %788 = vsyncpa [#allocation4], 1

</llo_original>
